<compile_context>
chip_gen: v5e
topology: v5e:2x2
jax: 0.10.0
libtpu: 0.0.40
codegen_flags: <defaults>
</compile_context>

<pallas_src>
import jax
import jax.numpy as jnp
from jax.experimental import pallas as pl
from jax.experimental.pallas import tpu as pltpu

# ----------------------------------------------------------------------------
# Problem sizes (synthetic "snake" env): observation vector + 4 actions.
# ----------------------------------------------------------------------------
OBS_SIZE = 32      # env.get_observation_space_size()
N_ACTIONS = 4      # env.get_action_space_size()
H1, H2, H3 = 256, 128, 64

LANE = 128         # TPU lane width
SUBLANE = 8        # TPU sublane count (f32)
OUT_PAD = 128      # action head zero-padded to lane width (lane-dense store)
TB_MAX = 1024      # max batch tile (per grid step)


def _round_up(n, m):
    return ((n + m - 1) // m) * m


# ----------------------------------------------------------------------------
# Fused 4-layer MLP kernel: one batch tile per grid step, weights resident.
# ----------------------------------------------------------------------------
def _mlp_kernel(x_ref,
                w1_ref, b1_ref,
                w2_ref, b2_ref,
                w3_ref, b3_ref,
                w4_ref, b4_ref,
                out_ref):
    # Layer 1: Linear(32, 256) + ReLU   (bf16 MXU matmul, f32 accumulate)
    x = x_ref[...].astype(jnp.bfloat16)                        # (TB, 32)
    h = jnp.dot(x, w1_ref[...], preferred_element_type=jnp.float32)
    h = jnp.maximum(h + b1_ref[...], 0.0)

    # Layer 2: Linear(256, 128) + ReLU
    h = jnp.dot(h.astype(jnp.bfloat16), w2_ref[...],
                preferred_element_type=jnp.float32)
    h = jnp.maximum(h + b2_ref[...], 0.0)

    # Layer 3: Linear(128, 64) + ReLU
    h = jnp.dot(h.astype(jnp.bfloat16), w3_ref[...],
                preferred_element_type=jnp.float32)
    h = jnp.maximum(h + b3_ref[...], 0.0)

    # Layer 4: Linear(64, 128-padded head), no activation; lane-dense store.
    q = jnp.dot(h.astype(jnp.bfloat16), w4_ref[...],
                preferred_element_type=jnp.float32)
    out_ref[...] = (q + b4_ref[...]).astype(out_ref.dtype)


# ----------------------------------------------------------------------------
# Parameter prep: pad layer-4 cols to lane width, cast weights to bf16.
# ----------------------------------------------------------------------------
def prepare_params(params):
    (w1, b1), (w2, b2), (w3, b3), (w4, b4) = params
    w4p = jnp.zeros((H3, OUT_PAD), jnp.float32).at[:, :N_ACTIONS].set(w4)
    b4p = jnp.zeros((1, OUT_PAD), jnp.float32).at[:, :N_ACTIONS].set(b4)
    bf16 = lambda w: w.astype(jnp.bfloat16)
    return ((bf16(w1), b1), (bf16(w2), b2), (bf16(w3), b3), (bf16(w4p), b4p))


# ----------------------------------------------------------------------------
# Wrapper: pad batch, launch batch-tiled pallas_call, slice result.
# ----------------------------------------------------------------------------
@jax.jit
def network_forward(x, prepared_params):
    """x: (B, OBS_SIZE) float32 -> q_values: (B, N_ACTIONS) float32."""
    (w1, b1), (w2, b2), (w3, b3), (w4, b4) = prepared_params
    B = x.shape[0]

    bp = _round_up(max(B, SUBLANE), SUBLANE)
    tb = min(TB_MAX, bp)
    bp = _round_up(bp, tb)

    # Zero-pad batch rows only (feature dim left at 32: streamed as-is).
    if bp == B:
        x_pad = x
    else:
        x_pad = jnp.zeros((bp, OBS_SIZE), jnp.float32).at[:B, :].set(x)

    grid = (bp // tb,)
    resident = lambda shape: pl.BlockSpec(shape, lambda i: (0,) * len(shape))

    out_pad = pl.pallas_call(
        _mlp_kernel,
        out_shape=jax.ShapeDtypeStruct((bp, OUT_PAD), jnp.float32),
        grid=grid,
        in_specs=[
            pl.BlockSpec((tb, OBS_SIZE), lambda i: (i, 0)),   # streamed x tile
            resident(w1.shape), resident(b1.shape),
            resident(w2.shape), resident(b2.shape),
            resident(w3.shape), resident(b3.shape),
            resident(w4.shape), resident(b4.shape),
        ],
        out_specs=pl.BlockSpec((tb, OUT_PAD), lambda i: (i, 0)),
        compiler_params=pltpu.CompilerParams(
            dimension_semantics=("parallel",),
            vmem_limit_bytes=32 * 1024 * 1024,
        ),
    )(x_pad, w1, b1, w2, b2, w3, b3, w4, b4)

    return out_pad[:B, :N_ACTIONS]


# ----------------------------------------------------------------------------
# Init + reference (matches PyTorch nn.Linear default init, weights as (in, out)).
# ----------------------------------------------------------------------------
def init_params(key):
    dims = [(OBS_SIZE, H1), (H1, H2), (H2, H3), (H3, N_ACTIONS)]
    params = []
    for i, (fan_in, fan_out) in enumerate(dims):
        kw, kb, key = jax.random.split(jax.random.fold_in(key, i), 3)
        bound = 1.0 / jnp.sqrt(fan_in)
        w = jax.random.uniform(kw, (fan_in, fan_out), jnp.float32, -bound, bound)
        b = jax.random.uniform(kb, (1, fan_out), jnp.float32, -bound, bound)
        params.append((w, b))
    return params


def _reference_forward(x, params):
    """Plain-JAX reference with the same bf16-input / f32-accumulate precision."""
    h = x
    for i, (w, b) in enumerate(params):
        h = jnp.dot(h.astype(jnp.bfloat16), w.astype(jnp.bfloat16),
                    preferred_element_type=jnp.float32) + b
        if i < len(params) - 1:
            h = jnp.maximum(h, 0.0)
    return h


if __name__ == "__main__":
    key = jax.random.PRNGKey(0)
    pkey, xkey = jax.random.split(key)

    params = init_params(pkey)
    prepared = prepare_params(params)

    # Small case (RL-style batch=2), exercises the single-tile path.
    x_small = jax.random.normal(xkey, (2, OBS_SIZE), dtype=jnp.float32)
    q_small = network_forward(x_small, prepared)
    jax.block_until_ready(q_small)
    q_small_ref = _reference_forward(x_small, params)
    assert q_small.shape == (2, N_ACTIONS)
    assert jnp.allclose(q_small, q_small_ref, atol=1e-2, rtol=1e-2)

    # Larger, non-multiple batch: exercises batch padding + bigger tile path.
    x_big = jax.random.normal(jax.random.fold_in(xkey, 1), (1000, OBS_SIZE),
                              dtype=jnp.float32)
    q_big = network_forward(x_big, prepared)
    jax.block_until_ready(q_big)
    q_big_ref = _reference_forward(x_big, params)
    assert q_big.shape == (1000, N_ACTIONS)
    assert jnp.allclose(q_big, q_big_ref, atol=1e-2, rtol=1e-2)

    # Multi-grid-step path (B > TB_MAX): streams batch tiles with pipelining.
    x_huge = jax.random.normal(jax.random.fold_in(xkey, 2), (2048 + 40, OBS_SIZE),
                               dtype=jnp.float32)
    q_huge = network_forward(x_huge, prepared)
    jax.block_until_ready(q_huge)
    q_huge_ref = _reference_forward(x_huge, params)
    assert q_huge.shape == (2088, N_ACTIONS)
    assert jnp.allclose(q_huge, q_huge_ref, atol=1e-2, rtol=1e-2)

    # Equivalent of Network.act for the first observation (argmax over q-values).
    _action = int(jnp.argmax(q_small, axis=1)[0])

    print("KERNEL_OK")
</pallas_src>

<mosaic_0001>
module attributes {stable_mosaic.version = 11 : i64} {
  func.func @_mlp_kernel(%arg0: i32, %arg1: memref<8x32xf32, #tpu.memory_space<vmem>>, %arg2: memref<32x256xbf16, #tpu.memory_space<vmem>>, %arg3: memref<1x256xf32, #tpu.memory_space<vmem>>, %arg4: memref<256x128xbf16, #tpu.memory_space<vmem>>, %arg5: memref<1x128xf32, #tpu.memory_space<vmem>>, %arg6: memref<128x64xbf16, #tpu.memory_space<vmem>>, %arg7: memref<1x64xf32, #tpu.memory_space<vmem>>, %arg8: memref<64x128xbf16, #tpu.memory_space<vmem>>, %arg9: memref<1x128xf32, #tpu.memory_space<vmem>>, %arg10: memref<8x128xf32, #tpu.memory_space<vmem>>) attributes {dimension_semantics = [#tpu.dimension_semantics<parallel>], iteration_bounds = array<i64: 1>, scalar_prefetch = 0 : i64, scratch_operands = 0 : i64, tpu.core_type = #tpu.core_type<tc>, window_params = [{transform_indices = @transform_0, window_bounds = array<i64: 8, 32>}, {pipeline_mode = #tpu.pipeline_mode<synchronous>, transform_indices = @transform_1, window_bounds = array<i64: 32, 256>}, {pipeline_mode = #tpu.pipeline_mode<synchronous>, transform_indices = @transform_2, window_bounds = array<i64: 1, 256>}, {pipeline_mode = #tpu.pipeline_mode<synchronous>, transform_indices = @transform_3, window_bounds = array<i64: 256, 128>}, {pipeline_mode = #tpu.pipeline_mode<synchronous>, transform_indices = @transform_4, window_bounds = array<i64: 1, 128>}, {pipeline_mode = #tpu.pipeline_mode<synchronous>, transform_indices = @transform_5, window_bounds = array<i64: 128, 64>}, {pipeline_mode = #tpu.pipeline_mode<synchronous>, transform_indices = @transform_6, window_bounds = array<i64: 1, 64>}, {pipeline_mode = #tpu.pipeline_mode<synchronous>, transform_indices = @transform_7, window_bounds = array<i64: 64, 128>}, {pipeline_mode = #tpu.pipeline_mode<synchronous>, transform_indices = @transform_8, window_bounds = array<i64: 1, 128>}, {transform_indices = @transform_9, window_bounds = array<i64: 8, 128>}]} {
    %c0 = arith.constant 0 : index
    %c0_0 = arith.constant 0 : index
    %0 = vector.load %arg1[%c0, %c0_0] : memref<8x32xf32, #tpu.memory_space<vmem>>, vector<8x32xf32>
    %1 = arith.truncf %0 : vector<8x32xf32> to vector<8x32xbf16>
    %c0_1 = arith.constant 0 : index
    %c0_2 = arith.constant 0 : index
    %2 = vector.load %arg2[%c0_1, %c0_2] : memref<32x256xbf16, #tpu.memory_space<vmem>>, vector<32x256xbf16>
    %cst = arith.constant dense<0.000000e+00> : vector<8x256xf32>
    %3 = tpu.matmul %1, %2, %cst {dimension_numbers = #tpu.dot_dimension_numbers<[1], [0], [0], [1], [0, 0, 1, 1], [], []>} : vector<8x32xbf16>, vector<32x256xbf16>, vector<8x256xf32> -> vector<8x256xf32>
    %c0_3 = arith.constant 0 : index
    %c0_4 = arith.constant 0 : index
    %4 = vector.load %arg3[%c0_3, %c0_4] : memref<1x256xf32, #tpu.memory_space<vmem>>, vector<1x256xf32>
    %5 = vector.broadcast %4 : vector<1x256xf32> to vector<8x256xf32>
    %6 = arith.addf %3, %5 : vector<8x256xf32>
    %cst_5 = arith.constant 0.000000e+00 : f32
    %7 = vector.broadcast %cst_5 : f32 to vector<8x256xf32>
    %8 = arith.maximumf %6, %7 : vector<8x256xf32>
    %9 = arith.truncf %8 : vector<8x256xf32> to vector<8x256xbf16>
    %c0_6 = arith.constant 0 : index
    %c0_7 = arith.constant 0 : index
    %10 = vector.load %arg4[%c0_6, %c0_7] : memref<256x128xbf16, #tpu.memory_space<vmem>>, vector<256x128xbf16>
    %cst_8 = arith.constant dense<0.000000e+00> : vector<8x128xf32>
    %11 = tpu.matmul %9, %10, %cst_8 {dimension_numbers = #tpu.dot_dimension_numbers<[1], [0], [0], [1], [0, 0, 1, 1], [], []>} : vector<8x256xbf16>, vector<256x128xbf16>, vector<8x128xf32> -> vector<8x128xf32>
    %c0_9 = arith.constant 0 : index
    %c0_10 = arith.constant 0 : index
    %12 = vector.load %arg5[%c0_9, %c0_10] : memref<1x128xf32, #tpu.memory_space<vmem>>, vector<1x128xf32>
    %13 = vector.broadcast %12 : vector<1x128xf32> to vector<8x128xf32>
    %14 = arith.addf %11, %13 : vector<8x128xf32>
    %cst_11 = arith.constant 0.000000e+00 : f32
    %15 = vector.broadcast %cst_11 : f32 to vector<8x128xf32>
    %16 = arith.maximumf %14, %15 : vector<8x128xf32>
    %17 = arith.truncf %16 : vector<8x128xf32> to vector<8x128xbf16>
    %c0_12 = arith.constant 0 : index
    %c0_13 = arith.constant 0 : index
    %18 = vector.load %arg6[%c0_12, %c0_13] : memref<128x64xbf16, #tpu.memory_space<vmem>>, vector<128x64xbf16>
    %cst_14 = arith.constant dense<0.000000e+00> : vector<8x64xf32>
    %19 = tpu.matmul %17, %18, %cst_14 {dimension_numbers = #tpu.dot_dimension_numbers<[1], [0], [0], [1], [0, 0, 1, 1], [], []>} : vector<8x128xbf16>, vector<128x64xbf16>, vector<8x64xf32> -> vector<8x64xf32>
    %c0_15 = arith.constant 0 : index
    %c0_16 = arith.constant 0 : index
    %20 = vector.load %arg7[%c0_15, %c0_16] : memref<1x64xf32, #tpu.memory_space<vmem>>, vector<1x64xf32>
    %21 = vector.broadcast %20 : vector<1x64xf32> to vector<8x64xf32>
    %22 = arith.addf %19, %21 : vector<8x64xf32>
    %cst_17 = arith.constant 0.000000e+00 : f32
    %23 = vector.broadcast %cst_17 : f32 to vector<8x64xf32>
    %24 = arith.maximumf %22, %23 : vector<8x64xf32>
    %25 = arith.truncf %24 : vector<8x64xf32> to vector<8x64xbf16>
    %c0_18 = arith.constant 0 : index
    %c0_19 = arith.constant 0 : index
    %26 = vector.load %arg8[%c0_18, %c0_19] : memref<64x128xbf16, #tpu.memory_space<vmem>>, vector<64x128xbf16>
    %cst_20 = arith.constant dense<0.000000e+00> : vector<8x128xf32>
    %27 = tpu.matmul %25, %26, %cst_20 {dimension_numbers = #tpu.dot_dimension_numbers<[1], [0], [0], [1], [0, 0, 1, 1], [], []>} : vector<8x64xbf16>, vector<64x128xbf16>, vector<8x128xf32> -> vector<8x128xf32>
    %c0_21 = arith.constant 0 : index
    %c0_22 = arith.constant 0 : index
    %28 = vector.load %arg9[%c0_21, %c0_22] : memref<1x128xf32, #tpu.memory_space<vmem>>, vector<1x128xf32>
    %29 = vector.broadcast %28 : vector<1x128xf32> to vector<8x128xf32>
    %30 = arith.addf %27, %29 : vector<8x128xf32>
    %c0_23 = arith.constant 0 : index
    %c0_24 = arith.constant 0 : index
    %31 = vector.load %arg10[%c0_23, %c0_24] : memref<8x128xf32, #tpu.memory_space<vmem>>, vector<8x128xf32>
    tpu.vector_store %arg10[%c0_23, %c0_24], %30 {strides = array<i32>} : memref<8x128xf32, #tpu.memory_space<vmem>>, vector<8x128xf32>,
    return
  }
  func.func @transform_0(%arg0: i32) -> (i32, i32) {
    %c0_i32 = arith.constant 0 : i32
    %c0_i32_0 = arith.constant 0 : i32
    return %arg0, %c0_i32 : i32, i32
  }
  func.func @transform_1(%arg0: i32) -> (i32, i32) {
    %c0_i32 = arith.constant 0 : i32
    %c0_i32_0 = arith.constant 0 : i32
    %c0_i32_1 = arith.constant 0 : i32
    return %c0_i32, %c0_i32_0 : i32, i32
  }
  func.func @transform_2(%arg0: i32) -> (i32, i32) {
    %c0_i32 = arith.constant 0 : i32
    %c0_i32_0 = arith.constant 0 : i32
    %c0_i32_1 = arith.constant 0 : i32
    return %c0_i32, %c0_i32_0 : i32, i32
  }
  func.func @transform_3(%arg0: i32) -> (i32, i32) {
    %c0_i32 = arith.constant 0 : i32
    %c0_i32_0 = arith.constant 0 : i32
    %c0_i32_1 = arith.constant 0 : i32
    return %c0_i32, %c0_i32_0 : i32, i32
  }
  func.func @transform_4(%arg0: i32) -> (i32, i32) {
    %c0_i32 = arith.constant 0 : i32
    %c0_i32_0 = arith.constant 0 : i32
    %c0_i32_1 = arith.constant 0 : i32
    return %c0_i32, %c0_i32_0 : i32, i32
  }
  func.func @transform_5(%arg0: i32) -> (i32, i32) {
    %c0_i32 = arith.constant 0 : i32
    %c0_i32_0 = arith.constant 0 : i32
    %c0_i32_1 = arith.constant 0 : i32
    return %c0_i32, %c0_i32_0 : i32, i32
  }
  func.func @transform_6(%arg0: i32) -> (i32, i32) {
    %c0_i32 = arith.constant 0 : i32
    %c0_i32_0 = arith.constant 0 : i32
    %c0_i32_1 = arith.constant 0 : i32
    return %c0_i32, %c0_i32_0 : i32, i32
  }
  func.func @transform_7(%arg0: i32) -> (i32, i32) {
    %c0_i32 = arith.constant 0 : i32
    %c0_i32_0 = arith.constant 0 : i32
    %c0_i32_1 = arith.constant 0 : i32
    return %c0_i32, %c0_i32_0 : i32, i32
  }
  func.func @transform_8(%arg0: i32) -> (i32, i32) {
    %c0_i32 = arith.constant 0 : i32
    %c0_i32_0 = arith.constant 0 : i32
    %c0_i32_1 = arith.constant 0 : i32
    return %c0_i32, %c0_i32_0 : i32, i32
  }
  func.func @transform_9(%arg0: i32) -> (i32, i32) {
    %c0_i32 = arith.constant 0 : i32
    %c0_i32_0 = arith.constant 0 : i32
    return %arg0, %c0_i32 : i32, i32
  }
}

</mosaic_0001>

<llo_original>
// kernel: network_forward.1
$region0: #{network_forward.1}
  #allocation0 [shape = 'u32[]', space=smem, size = 0x4, offset = 0x4, fixed_abs, tag = 'smem constant byte address 0x4 - core index']
  #allocation1 [shape = 'u32[72,128]{1,0:T(1,128)}', space=vmem, size = 0x9000, scoped, tag = 'internal scratch']
  %s0 = inlined_call_operand.vmem [shape: f32[8,32], index: 0, kind: input, shape index: {}]
  %s1 = inlined_call_operand.vmem [shape: bf16[32,256], index: 1, kind: input, shape index: {}]
  %s2 = inlined_call_operand.vmem [shape: f32[1,256], index: 2, kind: input, shape index: {}]
  %s3 = inlined_call_operand.hbm [shape: bf16[256,128], index: 3, kind: input, shape index: {}]
  %s4 = inlined_call_operand.vmem [shape: f32[1,128], index: 4, kind: input, shape index: {}]
  %s5 = inlined_call_operand.vmem [shape: bf16[128,64], index: 5, kind: input, shape index: {}]
  %s6 = inlined_call_operand.vmem [shape: f32[1,64], index: 6, kind: input, shape index: {}]
  %s7 = inlined_call_operand.vmem [shape: bf16[64,128], index: 7, kind: input, shape index: {}]
  %s8 = inlined_call_operand.vmem [shape: f32[1,128], index: 8, kind: input, shape index: {}]
  %s9 = inlined_call_operand.vmem [shape: f32[8,128], index: 9, kind: output, shape index: {}]
  %s10 = sld [smem:[#allocation0]]
  $region50: #{network_forward.1} parent=0
    _
  %s12 = ssub.s32 1, %s10
  %s13 = scalar_select 0, %s12, %s10
  $region1: #{network_forward.1} parent=0
    #allocation2 [shape = 'u8[65536]{0}', space=vmem, size = 0x10000, scoped, tag = 'input window, operand 3, single buffered']
    #allocation3 [shape = 's32[1]{0}', space=sflag, size = 0x4, scoped, tag = 'scoped memory for network_forward.1']
    %14 = vsyncpa [#allocation3], 0
    // Predicated region
    $region2: #{network_forward.1} parent=1 // pred_check
      _
    $region3: #{network_forward.1} parent=1 // pred_check_branch
      %16 = sbr.rel (0) target = $region5
    $region4: #{network_forward.1} parent=1 // pred_region
      _
    $region5: #{network_forward.1} parent=1 // pred_fallthru
      _
    // Predicated region
    $region6: #{network_forward.1} parent=1 // pred_check
      _
    $region7: #{network_forward.1} parent=1 // pred_check_branch
      %18 = sbr.rel (0) target = $region9
    $region8: #{network_forward.1} parent=1 // pred_region
      _
    $region9: #{network_forward.1} parent=1 // pred_fallthru
      _
    // Predicated region
    $region10: #{network_forward.1} parent=1 // pred_check
      _
    $region11: #{network_forward.1} parent=1 // pred_check_branch
      %20 = sbr.rel (0) target = $region13
    $region12: #{network_forward.1} parent=1 // pred_region
      _
    $region13: #{network_forward.1} parent=1 // pred_fallthru
      _
    // Predicated region
    $region14: #{network_forward.1} parent=1 // pred_check
      _
    $region15: #{network_forward.1} parent=1 // pred_check_branch
      %22 = sbr.rel (0) target = $region17
    $region16: #{network_forward.1} parent=1 // pred_region
      %24 = vsyncadd [#allocation3], 0
      %s25 = sshll.u32 %s3, 4
      %s26 = int_to_ptr.hbm [resolvable:$true] %s25
      %s27 = sshll.u32 [#allocation2], 4
      %s28 = int_to_ptr.vmem [resolvable:$true] %s27
      %33 = dma.hbm_to_vmem [thread:$0]  %s26, 2048, %s28, [#allocation3], 64, 64, 4
    $region17: #{network_forward.1} parent=1 // pred_fallthru
      _
    // Predicated region
    $region18: #{network_forward.1} parent=1 // pred_check
      _
    $region19: #{network_forward.1} parent=1 // pred_check_branch
      %35 = sbr.rel (0) target = $region21
    $region20: #{network_forward.1} parent=1 // pred_region
      _
    $region21: #{network_forward.1} parent=1 // pred_fallthru
      _
    // Predicated region
    $region22: #{network_forward.1} parent=1 // pred_check
      _
    $region23: #{network_forward.1} parent=1 // pred_check_branch
      %37 = sbr.rel (0) target = $region25
    $region24: #{network_forward.1} parent=1 // pred_region
      _
    $region25: #{network_forward.1} parent=1 // pred_fallthru
      _
    // Predicated region
    $region26: #{network_forward.1} parent=1 // pred_check
      _
    $region27: #{network_forward.1} parent=1 // pred_check_branch
      %39 = sbr.rel (0) target = $region29
    $region28: #{network_forward.1} parent=1 // pred_region
      _
    $region29: #{network_forward.1} parent=1 // pred_fallthru
      _
    // Predicated region
    $region30: #{network_forward.1} parent=1 // pred_check
      _
    $region31: #{network_forward.1} parent=1 // pred_check_branch
      %41 = sbr.rel (0) target = $region33
    $region32: #{network_forward.1} parent=1 // pred_region
      _
    $region33: #{network_forward.1} parent=1 // pred_fallthru
      _
    // Predicated region
    $region34: #{network_forward.1} parent=1 // pred_check
      _
    $region35: #{network_forward.1} parent=1 // pred_check_branch
      %43 = sbr.rel (0) target = $region37
    $region36: #{network_forward.1} parent=1 // pred_region
      _
    $region37: #{network_forward.1} parent=1 // pred_fallthru
      _
    // Predicated region
    $region38: #{network_forward.1} parent=1 // pred_check
      _
    $region39: #{network_forward.1} parent=1 // pred_check_branch
      %45 = sbr.rel (0) target = $region41
    $region40: #{network_forward.1} parent=1 // pred_region
      %47 = dma.done [#allocation3], 2048
    $region41: #{network_forward.1} parent=1 // pred_fallthru
      _
    %v49 = vld [vmem:[%s0] sm:$0xff]
    %v50 = vpack.c.bf16 %v49, %v49
    %v51 = vld [vmem:[%s1] sm:$0xff]
    %v52 = vld [vmem:[%s1 + $0x8] sm:$0xff]
    %v53 = vld [vmem:[%s1 + $0x10] sm:$0xff]
    %v54 = vld [vmem:[%s1 + $0x18] sm:$0xff]
    %v55 = vld [vmem:[%s2] sm:$0x3]
    %v57 = vperm.slane %v55, 0
    %v58 = vperm.slane %v55, 1
    %v65 = vunpack.c.l.b16 %v51
    %v66 = vunpack.c.h.b16 %v51
    %v67 = vunpack.c.l.b16 %v52
    %v68 = vunpack.c.h.b16 %v52
    %v69 = vunpack.c.l.b16 %v53
    %v70 = vunpack.c.h.b16 %v53
    %v71 = vunpack.c.l.b16 %v54
    %v72 = vunpack.c.h.b16 %v54
    %v73 = vpack.c.b16 %v67, %v65
    %v74 = vpack.c.b16 %v68, %v66
    %v75 = vpack.c.b16 %v71, %v69
    %v76 = vpack.c.b16 %v72, %v70
    %vm81 = vcmask 261120
    %v83 = vsel %vm81, %v50, 0
    %85 = vmatpush.bf16.msra.mxu0 0
    %86 = vmatpush.bf16.msra.mxu0 0
    %87 = vmatpush.bf16.msra.mxu0 0
    %88 = vmatpush.bf16.msra.mxu0 0
    %89 = vmatpush.bf16.msra.mxu0 0
    %90 = vmatpush.bf16.msra.mxu0 0
    %91 = vmatpush.bf16.msra.mxu0 %v75
    %92 = vmatpush.bf16.msra.mxu0 %v73
    %93 = vmatmul.bf16.gmra.mxu0 %v83
    %v94 = vpop.f32.mrf.mxu0
    %v95 = vadd.f32 %v57, %v94
    %v96 = vpop.f32.mrf.mxu0
    %97 = vdwg.mxu0
    %98 = vmatpush.bf16.msra.mxu0 0
    %99 = vmatpush.bf16.msra.mxu0 0
    %100 = vmatpush.bf16.msra.mxu0 0
    %101 = vmatpush.bf16.msra.mxu0 0
    %102 = vmatpush.bf16.msra.mxu0 0
    %103 = vmatpush.bf16.msra.mxu0 0
    %104 = vmatpush.bf16.msra.mxu0 %v76
    %105 = vmatpush.bf16.msra.mxu0 %v74
    %106 = vmatmul.bf16.gmra.mxu0 %v83
    %v107 = vpop.f32.mrf.mxu0
    %v108 = vadd.f32 %v58, %v107
    %v109 = vpop.f32.mrf.mxu0
    %110 = vdwg.mxu0
    %v111 = vmax.f32 %v95, 0.0
    %v112 = vmax.f32 %v108, 0.0
    %v113 = vpack.c.bf16 %v111, %v111
    %v114 = vpack.c.bf16 %v112, %v112
    %v115 = vld [vmem:[#allocation2] sm:$0xf]
    %v116 = vld [vmem:[#allocation2 + $0x4] sm:$0xf]
    %v117 = vld [vmem:[#allocation2 + $0x8] sm:$0xf]
    %v118 = vld [vmem:[#allocation2 + $0xc] sm:$0xf]
    %v119 = vld [vmem:[#allocation2 + $0x10] sm:$0xf]
    %v120 = vld [vmem:[#allocation2 + $0x14] sm:$0xf]
    %v121 = vld [vmem:[#allocation2 + $0x18] sm:$0xf]
    %v122 = vld [vmem:[#allocation2 + $0x1c] sm:$0xf]
    %v123 = vld [vmem:[#allocation2 + $0x20] sm:$0xf]
    %v124 = vld [vmem:[#allocation2 + $0x24] sm:$0xf]
    %v125 = vld [vmem:[#allocation2 + $0x28] sm:$0xf]
    %v126 = vld [vmem:[#allocation2 + $0x2c] sm:$0xf]
    %v127 = vld [vmem:[#allocation2 + $0x30] sm:$0xf]
    %v128 = vld [vmem:[#allocation2 + $0x34] sm:$0xf]
    %v129 = vld [vmem:[#allocation2 + $0x38] sm:$0xf]
    %v130 = vld [vmem:[#allocation2 + $0x3c] sm:$0xf]
    %v131 = vld [vmem:[#allocation2 + $0x40] sm:$0xf]
    %v132 = vld [vmem:[#allocation2 + $0x44] sm:$0xf]
    %v133 = vld [vmem:[#allocation2 + $0x48] sm:$0xf]
    %v134 = vld [vmem:[#allocation2 + $0x4c] sm:$0xf]
    %v135 = vld [vmem:[#allocation2 + $0x50] sm:$0xf]
    %v136 = vld [vmem:[#allocation2 + $0x54] sm:$0xf]
    %v137 = vld [vmem:[#allocation2 + $0x58] sm:$0xf]
    %v138 = vld [vmem:[#allocation2 + $0x5c] sm:$0xf]
    %v139 = vld [vmem:[#allocation2 + $0x60] sm:$0xf]
    %v140 = vld [vmem:[#allocation2 + $0x64] sm:$0xf]
    %v141 = vld [vmem:[#allocation2 + $0x68] sm:$0xf]
    %v142 = vld [vmem:[#allocation2 + $0x6c] sm:$0xf]
    %v143 = vld [vmem:[#allocation2 + $0x70] sm:$0xf]
    %v144 = vld [vmem:[#allocation2 + $0x74] sm:$0xf]
    %v145 = vld [vmem:[#allocation2 + $0x78] sm:$0xf]
    %v146 = vld [vmem:[#allocation2 + $0x7c] sm:$0xf]
    %v147 = vld [vmem:[%s4] sm:$0x1]
    %v149 = vperm.slane %v147, 0
    %v183 = vunpack.c.l.b16 %v115
    %v184 = vunpack.c.l.b16 %v116
    %v185 = vunpack.c.l.b16 %v117
    %v186 = vunpack.c.l.b16 %v118
    %v187 = vunpack.c.l.b16 %v119
    %v188 = vunpack.c.l.b16 %v120
    %v189 = vunpack.c.l.b16 %v121
    %v190 = vunpack.c.l.b16 %v122
    %v191 = vunpack.c.l.b16 %v123
    %v192 = vunpack.c.l.b16 %v124
    %v193 = vunpack.c.l.b16 %v125
    %v194 = vunpack.c.l.b16 %v126
    %v195 = vunpack.c.l.b16 %v127
    %v196 = vunpack.c.l.b16 %v128
    %v197 = vunpack.c.l.b16 %v129
    %v198 = vunpack.c.l.b16 %v130
    %v199 = vunpack.c.l.b16 %v131
    %v200 = vunpack.c.l.b16 %v132
    %v201 = vunpack.c.l.b16 %v133
    %v202 = vunpack.c.l.b16 %v134
    %v203 = vunpack.c.l.b16 %v135
    %v204 = vunpack.c.l.b16 %v136
    %v205 = vunpack.c.l.b16 %v137
    %v206 = vunpack.c.l.b16 %v138
    %v207 = vunpack.c.l.b16 %v139
    %v208 = vunpack.c.l.b16 %v140
    %v209 = vunpack.c.l.b16 %v141
    %v210 = vunpack.c.l.b16 %v142
    %v211 = vunpack.c.l.b16 %v143
    %v212 = vunpack.c.l.b16 %v144
    %v213 = vunpack.c.l.b16 %v145
    %v214 = vunpack.c.l.b16 %v146
    %v215 = vpack.c.b16 %v184, %v183
    %v216 = vpack.c.b16 %v186, %v185
    %v217 = vpack.c.b16 %v188, %v187
    %v218 = vpack.c.b16 %v190, %v189
    %v219 = vpack.c.b16 %v192, %v191
    %v220 = vpack.c.b16 %v194, %v193
    %v221 = vpack.c.b16 %v196, %v195
    %v222 = vpack.c.b16 %v198, %v197
    %v223 = vpack.c.b16 %v200, %v199
    %v224 = vpack.c.b16 %v202, %v201
    %v225 = vpack.c.b16 %v204, %v203
    %v226 = vpack.c.b16 %v206, %v205
    %v227 = vpack.c.b16 %v208, %v207
    %v228 = vpack.c.b16 %v210, %v209
    %v229 = vpack.c.b16 %v212, %v211
    %v230 = vpack.c.b16 %v214, %v213
    %247 = vmatpush.bf16.msra.mxu0 %v222
    %248 = vmatpush.bf16.msra.mxu0 %v221
    %249 = vmatpush.bf16.msra.mxu0 %v220
    %250 = vmatpush.bf16.msra.mxu0 %v219
    %251 = vmatpush.bf16.msra.mxu0 %v218
    %252 = vmatpush.bf16.msra.mxu0 %v217
    %253 = vmatpush.bf16.msra.mxu0 %v216
    %254 = vmatpush.bf16.msra.mxu0 %v215
    %255 = vmatmul.bf16.gmra.mxu0 %v113
    %v256 = vpop.f32.mrf.mxu0
    %v257 = vadd.f32 %v149, %v256
    %v258 = vpop.f32.mrf.mxu0
    %259 = vdwg.mxu0
    %260 = vmatpush.bf16.msra.mxu0 %v230
    %261 = vmatpush.bf16.msra.mxu0 %v229
    %262 = vmatpush.bf16.msra.mxu0 %v228
    %263 = vmatpush.bf16.msra.mxu0 %v227
    %264 = vmatpush.bf16.msra.mxu0 %v226
    %265 = vmatpush.bf16.msra.mxu0 %v225
    %266 = vmatpush.bf16.msra.mxu0 %v224
    %267 = vmatpush.bf16.msra.mxu0 %v223
    %268 = vmatmul.bf16.gmra.mxu0 %v114
    %v269 = vpop.f32.mrf.mxu0
    %v270 = vadd.f32 %v257, %v269
    %v271 = vpop.f32.mrf.mxu0
    %272 = vdwg.mxu0
    %v273 = vmax.f32 %v270, 0.0
    %v274 = vpack.c.bf16 %v273, %v273
    %v275 = vld [vmem:[%s5] sm:$0xf]
    %v276 = vld [vmem:[%s5 + $0x4] sm:$0xf]
    %v277 = vld [vmem:[%s5 + $0x8] sm:$0xf]
    %v278 = vld [vmem:[%s5 + $0xc] sm:$0xf]
    %v279 = vld [vmem:[%s5 + $0x10] sm:$0xf]
    %v280 = vld [vmem:[%s5 + $0x14] sm:$0xf]
    %v281 = vld [vmem:[%s5 + $0x18] sm:$0xf]
    %v282 = vld [vmem:[%s5 + $0x1c] sm:$0xf]
    %v283 = vld [vmem:[%s5 + $0x20] sm:$0xf]
    %v284 = vld [vmem:[%s5 + $0x24] sm:$0xf]
    %v285 = vld [vmem:[%s5 + $0x28] sm:$0xf]
    %v286 = vld [vmem:[%s5 + $0x2c] sm:$0xf]
    %v287 = vld [vmem:[%s5 + $0x30] sm:$0xf]
    %v288 = vld [vmem:[%s5 + $0x34] sm:$0xf]
    %v289 = vld [vmem:[%s5 + $0x38] sm:$0xf]
    %v290 = vld [vmem:[%s5 + $0x3c] sm:$0xf]
    %v291 = vld [vmem:[%s6] sm:$0x1]
    %v293 = vperm.slane %v291, 0
    %v311 = vunpack.c.l.b16 %v275
    %v312 = vunpack.c.l.b16 %v276
    %v313 = vunpack.c.l.b16 %v277
    %v314 = vunpack.c.l.b16 %v278
    %v315 = vunpack.c.l.b16 %v279
    %v316 = vunpack.c.l.b16 %v280
    %v317 = vunpack.c.l.b16 %v281
    %v318 = vunpack.c.l.b16 %v282
    %v319 = vunpack.c.l.b16 %v283
    %v320 = vunpack.c.l.b16 %v284
    %v321 = vunpack.c.l.b16 %v285
    %v322 = vunpack.c.l.b16 %v286
    %v323 = vunpack.c.l.b16 %v287
    %v324 = vunpack.c.l.b16 %v288
    %v325 = vunpack.c.l.b16 %v289
    %v326 = vunpack.c.l.b16 %v290
    %v327 = vpack.c.b16 %v312, %v311
    %v328 = vpack.c.b16 %v314, %v313
    %v329 = vpack.c.b16 %v316, %v315
    %v330 = vpack.c.b16 %v318, %v317
    %v331 = vpack.c.b16 %v320, %v319
    %v332 = vpack.c.b16 %v322, %v321
    %v333 = vpack.c.b16 %v324, %v323
    %v334 = vpack.c.b16 %v326, %v325
    %343 = vmatpush.bf16.msra.mxu0 %v334
    %344 = vmatpush.bf16.msra.mxu0 %v333
    %345 = vmatpush.bf16.msra.mxu0 %v332
    %346 = vmatpush.bf16.msra.mxu0 %v331
    %347 = vmatpush.bf16.msra.mxu0 %v330
    %348 = vmatpush.bf16.msra.mxu0 %v329
    %349 = vmatpush.bf16.msra.mxu0 %v328
    %350 = vmatpush.bf16.msra.mxu0 %v327
    %351 = vmatmul.bf16.gmra.mxu0 %v274
    %v352 = vpop.f32.mrf.mxu0
    %v353 = vadd.f32 %v293, %v352
    %v354 = vpop.f32.mrf.mxu0
    %355 = vdwg.mxu0
    %v356 = vmax.f32 %v353, 0.0
    %v357 = vpack.c.bf16 %v356, %v356
    %v358 = vld [vmem:[%s7] sm:$0xf]
    %v359 = vld [vmem:[%s7 + $0x4] sm:$0xf]
    %v360 = vld [vmem:[%s7 + $0x8] sm:$0xf]
    %v361 = vld [vmem:[%s7 + $0xc] sm:$0xf]
    %v362 = vld [vmem:[%s7 + $0x10] sm:$0xf]
    %v363 = vld [vmem:[%s7 + $0x14] sm:$0xf]
    %v364 = vld [vmem:[%s7 + $0x18] sm:$0xf]
    %v365 = vld [vmem:[%s7 + $0x1c] sm:$0xf]
    %v366 = vld [vmem:[%s8] sm:$0x1]
    %v368 = vperm.slane %v366, 0
    %v378 = vunpack.c.l.b16 %v358
    %v379 = vunpack.c.l.b16 %v359
    %v380 = vunpack.c.l.b16 %v360
    %v381 = vunpack.c.l.b16 %v361
    %v382 = vunpack.c.l.b16 %v362
    %v383 = vunpack.c.l.b16 %v363
    %v384 = vunpack.c.l.b16 %v364
    %v385 = vunpack.c.l.b16 %v365
    %v386 = vpack.c.b16 %v379, %v378
    %v387 = vpack.c.b16 %v381, %v380
    %v388 = vpack.c.b16 %v383, %v382
    %v389 = vpack.c.b16 %v385, %v384
    %vm394 = vcmask 523264
    %v396 = vsel %vm394, %v357, 0
    %398 = vmatpush.bf16.msra.mxu0 0
    %399 = vmatpush.bf16.msra.mxu0 0
    %400 = vmatpush.bf16.msra.mxu0 0
    %401 = vmatpush.bf16.msra.mxu0 0
    %402 = vmatpush.bf16.msra.mxu0 %v389
    %403 = vmatpush.bf16.msra.mxu0 %v388
    %404 = vmatpush.bf16.msra.mxu0 %v387
    %405 = vmatpush.bf16.msra.mxu0 %v386
    %406 = vmatmul.bf16.gmra.mxu0 %v396
    %v407 = vpop.f32.mrf.mxu0
    %v408 = vadd.f32 %v368, %v407
    %v409 = vpop.f32.mrf.mxu0
    %410 = vdwg.mxu0
    %411 = vst [vmem:[%s9] sm:$0xff] %v408
    // Predicated region
    $region42: #{network_forward.1} parent=1 // pred_check
      _
    $region43: #{network_forward.1} parent=1 // pred_check_branch
      %413 = sbr.rel (0) target = $region45
    $region44: #{network_forward.1} parent=1 // pred_region
      _
    $region45: #{network_forward.1} parent=1 // pred_fallthru
      _
    // Predicated region
    $region46: #{network_forward.1} parent=1 // pred_check
      _
    $region47: #{network_forward.1} parent=1 // pred_check_branch
      %415 = sbr.rel (0) target = $region49
    $region48: #{network_forward.1} parent=1 // pred_region
      _
    $region49: #{network_forward.1} parent=1 // pred_fallthru
      _
    %416 = vsyncpa [#allocation3], 1

</llo_original>
